<compile_context>
chip_gen: v7x
topology: tpu7x:2x2x1
jax: 0.10.0
libtpu: 0.0.40
codegen_flags: <defaults>
</compile_context>

<pallas_src>
import functools

import jax
import jax.numpy as jnp
from jax.experimental import pallas as pl
from jax.experimental.pallas import tpu as pltpu

NUM_RACES = 7
OUT_PAD = 128            # lane-dense padded output width (NUM_RACES -> 128)
BN_EPS = 1e-5
LEAKY_SLOPE = 0.01

# Row layout of the small per-feature vectors inside the packed slab.
ROW_G0 = 0               # BN0 gamma  (num_verb lanes)
ROW_B0 = 1               # BN0 beta   (num_verb lanes)
ROW_G = 2                # rows 2..5 : gamma of BN after Linear 1..4 (hid lanes)
ROW_BE = 6               # rows 6..9 : beta  of BN after Linear 1..4 (hid lanes)
ROW_BB5 = 10             # row 10    : final Linear bias, zero-padded to OUT_PAD
NUM_VEC_ROWS = 12


def _align(n, m):
    return ((n + m - 1) // m) * m


def _slab_layout(num_verb, hid):
    """Row offsets of each parameter block in the packed slab (8-row aligned)."""
    r_vec = 0
    r_w1 = _align(NUM_VEC_ROWS, 8)
    r_w2 = r_w1 + _align(num_verb, 8)
    r_w3 = r_w2 + _align(hid, 8)
    r_w4 = r_w3 + _align(hid, 8)
    r_w5 = r_w4 + _align(hid, 8)
    total_rows = r_w5 + _align(hid, 8)
    width = max(OUT_PAD, _align(num_verb, 128), _align(hid, 128))
    return (r_vec, r_w1, r_w2, r_w3, r_w4, r_w5), total_rows, width


def gender_classifier_kernel(x_ref, p_ref, out_ref, *, num_verb, hid):
    (r_vec, r_w1, r_w2, r_w3, r_w4, r_w5), _, _ = _slab_layout(num_verb, hid)

    h = x_ref[...]                       # (B, num_verb) f32
    inv_n = 1.0 / h.shape[0]

    def batch_norm(h, gamma, beta):
        # Training-mode BN, one-pass stats: var = E[h^2] - mean^2 (slightly less
        # numerically stable than the centered two-pass form; fine at these
        # magnitudes / 1e-4 tolerance).  Normalize folded to h*scale + shift.
        s = jnp.sum(h, axis=0, keepdims=True)
        sq = jnp.sum(h * h, axis=0, keepdims=True)
        mean = s * inv_n
        var = jnp.maximum(sq * inv_n - mean * mean, 0.0)
        scale = jax.lax.rsqrt(var + BN_EPS) * gamma          # (1, d) — EUP rsqrt
        shift = beta - mean * scale                          # (1, d)
        return h * scale + shift                             # 2 full-width VPU ops

    def leaky_relu(h):
        # slope < 1  =>  max(h, slope*h) == leaky_relu(h)
        return jnp.maximum(h, LEAKY_SLOPE * h)

    # Input BatchNorm1d(num_verb).
    h = batch_norm(h,
                   p_ref[r_vec + ROW_G0:r_vec + ROW_G0 + 1, :num_verb],
                   p_ref[r_vec + ROW_B0:r_vec + ROW_B0 + 1, :num_verb])

    # Layers 1..4: Linear -> BN -> LeakyReLU.  Linear biases omitted: the
    # batch-mean subtraction of training-mode BN cancels them exactly.
    for i, (r_w, k_dim) in enumerate(((r_w1, num_verb), (r_w2, hid),
                                      (r_w3, hid), (r_w4, hid))):
        w = p_ref[r_w:r_w + k_dim, :hid]
        h = jnp.dot(h, w, preferred_element_type=jnp.float32)
        h = leaky_relu(batch_norm(
            h,
            p_ref[r_vec + ROW_G + i:r_vec + ROW_G + i + 1, :hid],
            p_ref[r_vec + ROW_BE + i:r_vec + ROW_BE + i + 1, :hid]))

    # Final Linear(hid, numRaces), lane-dense padded to OUT_PAD columns.
    out = jnp.dot(h, p_ref[r_w5:r_w5 + hid, :OUT_PAD],
                  preferred_element_type=jnp.float32)
    out_ref[...] = out + p_ref[r_vec + ROW_BB5:r_vec + ROW_BB5 + 1, :OUT_PAD]


def gender_classifier_forward(x, param_slab, *, num_verb, hid):
    """x: (B, num_verb) f32.  Returns the lane-dense (B, OUT_PAD) logits slab;
    the caller slices [:, :NUM_RACES]."""
    batch = x.shape[0]
    kernel = functools.partial(gender_classifier_kernel,
                               num_verb=num_verb, hid=hid)
    vmem = pl.BlockSpec(memory_space=pltpu.MemorySpace.VMEM)
    cost = pl.CostEstimate(
        flops=2 * batch * (num_verb * hid + 3 * hid * hid + hid * OUT_PAD),
        transcendentals=num_verb + 4 * hid,                  # rsqrt per BN column
        bytes_accessed=(x.size + param_slab.size + batch * OUT_PAD) * 4,
    )
    return pl.pallas_call(
        kernel,
        out_shape=jax.ShapeDtypeStruct((batch, OUT_PAD), jnp.float32),
        in_specs=[vmem, vmem],
        out_specs=vmem,
        cost_estimate=cost,
    )(x, param_slab)


def init_raw_params(key, num_verb, hid_size):
    """Synthetic parameters matching the nn.Module layout (torch semantics)."""
    keys = jax.random.split(key, 10)
    it = iter(keys)

    def linear(k, fan_in, fan_out):
        kw, kb = jax.random.split(k)
        bound = 1.0 / jnp.sqrt(fan_in)
        # stored as (in, out): transpose of torch's (out, in) weight
        w = jax.random.uniform(kw, (fan_in, fan_out), jnp.float32, -bound, bound)
        b = jax.random.uniform(kb, (fan_out,), jnp.float32, -bound, bound)
        return w, b

    def bn(k, dim):
        kg, kb = jax.random.split(k)
        gamma = 1.0 + 0.1 * jax.random.normal(kg, (dim,), jnp.float32)
        beta = 0.1 * jax.random.normal(kb, (dim,), jnp.float32)
        return gamma, beta

    g0, b0 = bn(next(it), num_verb)
    w1, bb1 = linear(next(it), num_verb, hid_size)
    g1, be1 = bn(next(it), hid_size)
    w2, bb2 = linear(next(it), hid_size, hid_size)
    g2, be2 = bn(next(it), hid_size)
    w3, bb3 = linear(next(it), hid_size, hid_size)
    g3, be3 = bn(next(it), hid_size)
    w4, bb4 = linear(next(it), hid_size, hid_size)
    g4, be4 = bn(next(it), hid_size)
    w5, bb5 = linear(next(it), hid_size, NUM_RACES)

    return (g0, b0,
            w1, bb1, g1, be1,
            w2, bb2, g2, be2,
            w3, bb3, g3, be3,
            w4, bb4, g4, be4,
            w5, bb5)


def pack_params(raw, num_verb, hid_size):
    """Pack ALL parameters into one DMA-friendly (rows, 128k) f32 slab."""
    (g0, b0,
     w1, _bb1, g1, be1,
     w2, _bb2, g2, be2,
     w3, _bb3, g3, be3,
     w4, _bb4, g4, be4,
     w5, bb5) = raw
    (r_vec, r_w1, r_w2, r_w3, r_w4, r_w5), total_rows, width = \
        _slab_layout(num_verb, hid_size)

    slab = jnp.zeros((total_rows, width), jnp.float32)
    slab = slab.at[r_vec + ROW_G0, :num_verb].set(g0)
    slab = slab.at[r_vec + ROW_B0, :num_verb].set(b0)
    for i, (g, be) in enumerate(((g1, be1), (g2, be2), (g3, be3), (g4, be4))):
        slab = slab.at[r_vec + ROW_G + i, :hid_size].set(g)
        slab = slab.at[r_vec + ROW_BE + i, :hid_size].set(be)
    slab = slab.at[r_vec + ROW_BB5, :NUM_RACES].set(bb5)
    # bb1..bb4 intentionally dropped: cancelled by BN batch-mean subtraction.
    slab = slab.at[r_w1:r_w1 + num_verb, :hid_size].set(w1)
    slab = slab.at[r_w2:r_w2 + hid_size, :hid_size].set(w2)
    slab = slab.at[r_w3:r_w3 + hid_size, :hid_size].set(w3)
    slab = slab.at[r_w4:r_w4 + hid_size, :hid_size].set(w4)
    slab = slab.at[r_w5:r_w5 + hid_size, :NUM_RACES].set(w5)
    return slab


def reference_forward(x, raw):
    """Pure-JAX reference of the ORIGINAL module math (all linear biases,
    centered two-pass training-mode BatchNorm)."""
    (g0, b0,
     w1, bb1, g1, be1,
     w2, bb2, g2, be2,
     w3, bb3, g3, be3,
     w4, bb4, g4, be4,
     w5, bb5) = raw

    def bn(h, gamma, beta):
        mean = jnp.mean(h, axis=0, keepdims=True)
        c = h - mean
        var = jnp.mean(c * c, axis=0, keepdims=True)
        return c * jax.lax.rsqrt(var + BN_EPS) * gamma + beta

    def lrelu(h):
        return jnp.where(h >= 0, h, LEAKY_SLOPE * h)

    h = bn(x, g0, b0)
    for w, bb, g, be in ((w1, bb1, g1, be1), (w2, bb2, g2, be2),
                         (w3, bb3, g3, be3), (w4, bb4, g4, be4)):
        h = lrelu(bn(h @ w + bb, g, be))
    return h @ w5 + bb5


if __name__ == "__main__":
    batch = 8
    num_verb = 32   # args-dependent in the original; synthetic small value
    hid_size = 32   # args.hid_size

    key = jax.random.PRNGKey(0)
    k_x, k_p = jax.random.split(key)
    x = jax.random.normal(k_x, (batch, num_verb), jnp.float32)
    raw = init_raw_params(k_p, num_verb, hid_size)
    slab = pack_params(raw, num_verb, hid_size)

    fwd = jax.jit(functools.partial(gender_classifier_forward,
                                    num_verb=num_verb, hid=hid_size))
    out_pad = jax.block_until_ready(fwd(x, slab))      # (batch, OUT_PAD)
    out = out_pad[:, :NUM_RACES]                        # consumer-side slice

    ref = reference_forward(x, raw)
    assert out_pad.shape == (batch, OUT_PAD)
    assert out.shape == (batch, NUM_RACES)
    assert jnp.allclose(out, ref, atol=1e-4, rtol=1e-4), "mismatch vs reference"

    print("KERNEL_OK")
</pallas_src>

<mosaic_0001>
module attributes {stable_mosaic.version = 11 : i64} {
  func.func @gender_classifier_kernel(%arg0: memref<8x32xf32, #tpu.memory_space<vmem>>, %arg1: memref<176x128xf32, #tpu.memory_space<vmem>>, %arg2: memref<8x128xf32, #tpu.memory_space<vmem>>) attributes {dimension_semantics = [], scalar_prefetch = 0 : i64, scratch_operands = 0 : i64, tpu.core_type = #tpu.core_type<tc>} {
    %c0 = arith.constant 0 : index
    %c0_0 = arith.constant 0 : index
    %0 = vector.load %arg0[%c0, %c0_0] : memref<8x32xf32, #tpu.memory_space<vmem>>, vector<8x32xf32>
    %c0_1 = arith.constant 0 : index
    %c0_2 = arith.constant 0 : index
    %1 = vector.load %arg1[%c0_1, %c0_2] : memref<176x128xf32, #tpu.memory_space<vmem>>, vector<1x32xf32>
    %c1 = arith.constant 1 : index
    %c0_3 = arith.constant 0 : index
    %2 = vector.load %arg1[%c1, %c0_3] : memref<176x128xf32, #tpu.memory_space<vmem>>, vector<1x32xf32>
    %cst = arith.constant dense<0.000000e+00> : vector<32xf32>
    %3 = vector.multi_reduction <add>, %0, %cst [0] : vector<8x32xf32> to vector<32xf32>
    %4 = vector.shape_cast %3 : vector<32xf32> to vector<1x32xf32>
    %5 = arith.mulf %0, %0 : vector<8x32xf32>
    %cst_4 = arith.constant dense<0.000000e+00> : vector<32xf32>
    %6 = vector.multi_reduction <add>, %5, %cst_4 [0] : vector<8x32xf32> to vector<32xf32>
    %7 = vector.shape_cast %6 : vector<32xf32> to vector<1x32xf32>
    %cst_5 = arith.constant 1.250000e-01 : f32
    %8 = vector.broadcast %cst_5 : f32 to vector<1x32xf32>
    %9 = arith.mulf %4, %8 : vector<1x32xf32>
    %cst_6 = arith.constant 1.250000e-01 : f32
    %10 = vector.broadcast %cst_6 : f32 to vector<1x32xf32>
    %11 = arith.mulf %7, %10 : vector<1x32xf32>
    %12 = arith.mulf %9, %9 : vector<1x32xf32>
    %13 = arith.subf %11, %12 : vector<1x32xf32>
    %cst_7 = arith.constant 0.000000e+00 : f32
    %14 = vector.broadcast %cst_7 : f32 to vector<1x32xf32>
    %15 = arith.maximumf %13, %14 : vector<1x32xf32>
    %cst_8 = arith.constant 9.99999974E-6 : f32
    %16 = vector.broadcast %cst_8 : f32 to vector<1x32xf32>
    %17 = arith.addf %15, %16 : vector<1x32xf32>
    %18 = math.rsqrt %17 : vector<1x32xf32>
    %19 = arith.mulf %18, %1 : vector<1x32xf32>
    %20 = arith.mulf %9, %19 : vector<1x32xf32>
    %21 = arith.subf %2, %20 : vector<1x32xf32>
    %22 = vector.broadcast %19 : vector<1x32xf32> to vector<8x32xf32>
    %23 = arith.mulf %0, %22 : vector<8x32xf32>
    %24 = vector.broadcast %21 : vector<1x32xf32> to vector<8x32xf32>
    %25 = arith.addf %23, %24 : vector<8x32xf32>
    %c16 = arith.constant 16 : index
    %c0_9 = arith.constant 0 : index
    %26 = vector.load %arg1[%c16, %c0_9] : memref<176x128xf32, #tpu.memory_space<vmem>>, vector<32x32xf32>
    %cst_10 = arith.constant dense<0.000000e+00> : vector<8x32xf32>
    %27 = tpu.matmul %25, %26, %cst_10 {dimension_numbers = #tpu.dot_dimension_numbers<[1], [0], [0], [1], [0, 0, 1, 1], [], []>} : vector<8x32xf32>, vector<32x32xf32>, vector<8x32xf32> -> vector<8x32xf32>
    %c2 = arith.constant 2 : index
    %c0_11 = arith.constant 0 : index
    %28 = vector.load %arg1[%c2, %c0_11] : memref<176x128xf32, #tpu.memory_space<vmem>>, vector<1x32xf32>
    %c6 = arith.constant 6 : index
    %c0_12 = arith.constant 0 : index
    %29 = vector.load %arg1[%c6, %c0_12] : memref<176x128xf32, #tpu.memory_space<vmem>>, vector<1x32xf32>
    %cst_13 = arith.constant dense<0.000000e+00> : vector<32xf32>
    %30 = vector.multi_reduction <add>, %27, %cst_13 [0] : vector<8x32xf32> to vector<32xf32>
    %31 = vector.shape_cast %30 : vector<32xf32> to vector<1x32xf32>
    %32 = arith.mulf %27, %27 : vector<8x32xf32>
    %cst_14 = arith.constant dense<0.000000e+00> : vector<32xf32>
    %33 = vector.multi_reduction <add>, %32, %cst_14 [0] : vector<8x32xf32> to vector<32xf32>
    %34 = vector.shape_cast %33 : vector<32xf32> to vector<1x32xf32>
    %cst_15 = arith.constant 1.250000e-01 : f32
    %35 = vector.broadcast %cst_15 : f32 to vector<1x32xf32>
    %36 = arith.mulf %31, %35 : vector<1x32xf32>
    %cst_16 = arith.constant 1.250000e-01 : f32
    %37 = vector.broadcast %cst_16 : f32 to vector<1x32xf32>
    %38 = arith.mulf %34, %37 : vector<1x32xf32>
    %39 = arith.mulf %36, %36 : vector<1x32xf32>
    %40 = arith.subf %38, %39 : vector<1x32xf32>
    %cst_17 = arith.constant 0.000000e+00 : f32
    %41 = vector.broadcast %cst_17 : f32 to vector<1x32xf32>
    %42 = arith.maximumf %40, %41 : vector<1x32xf32>
    %cst_18 = arith.constant 9.99999974E-6 : f32
    %43 = vector.broadcast %cst_18 : f32 to vector<1x32xf32>
    %44 = arith.addf %42, %43 : vector<1x32xf32>
    %45 = math.rsqrt %44 : vector<1x32xf32>
    %46 = arith.mulf %45, %28 : vector<1x32xf32>
    %47 = arith.mulf %36, %46 : vector<1x32xf32>
    %48 = arith.subf %29, %47 : vector<1x32xf32>
    %49 = vector.broadcast %46 : vector<1x32xf32> to vector<8x32xf32>
    %50 = arith.mulf %27, %49 : vector<8x32xf32>
    %51 = vector.broadcast %48 : vector<1x32xf32> to vector<8x32xf32>
    %52 = arith.addf %50, %51 : vector<8x32xf32>
    %cst_19 = arith.constant 0.00999999977 : f32
    %53 = vector.broadcast %cst_19 : f32 to vector<8x32xf32>
    %54 = arith.mulf %53, %52 : vector<8x32xf32>
    %55 = arith.maximumf %52, %54 : vector<8x32xf32>
    %c48 = arith.constant 48 : index
    %c0_20 = arith.constant 0 : index
    %56 = vector.load %arg1[%c48, %c0_20] : memref<176x128xf32, #tpu.memory_space<vmem>>, vector<32x32xf32>
    %cst_21 = arith.constant dense<0.000000e+00> : vector<8x32xf32>
    %57 = tpu.matmul %55, %56, %cst_21 {dimension_numbers = #tpu.dot_dimension_numbers<[1], [0], [0], [1], [0, 0, 1, 1], [], []>} : vector<8x32xf32>, vector<32x32xf32>, vector<8x32xf32> -> vector<8x32xf32>
    %c3 = arith.constant 3 : index
    %c0_22 = arith.constant 0 : index
    %58 = vector.load %arg1[%c3, %c0_22] : memref<176x128xf32, #tpu.memory_space<vmem>>, vector<1x32xf32>
    %c7 = arith.constant 7 : index
    %c0_23 = arith.constant 0 : index
    %59 = vector.load %arg1[%c7, %c0_23] : memref<176x128xf32, #tpu.memory_space<vmem>>, vector<1x32xf32>
    %cst_24 = arith.constant dense<0.000000e+00> : vector<32xf32>
    %60 = vector.multi_reduction <add>, %57, %cst_24 [0] : vector<8x32xf32> to vector<32xf32>
    %61 = vector.shape_cast %60 : vector<32xf32> to vector<1x32xf32>
    %62 = arith.mulf %57, %57 : vector<8x32xf32>
    %cst_25 = arith.constant dense<0.000000e+00> : vector<32xf32>
    %63 = vector.multi_reduction <add>, %62, %cst_25 [0] : vector<8x32xf32> to vector<32xf32>
    %64 = vector.shape_cast %63 : vector<32xf32> to vector<1x32xf32>
    %cst_26 = arith.constant 1.250000e-01 : f32
    %65 = vector.broadcast %cst_26 : f32 to vector<1x32xf32>
    %66 = arith.mulf %61, %65 : vector<1x32xf32>
    %cst_27 = arith.constant 1.250000e-01 : f32
    %67 = vector.broadcast %cst_27 : f32 to vector<1x32xf32>
    %68 = arith.mulf %64, %67 : vector<1x32xf32>
    %69 = arith.mulf %66, %66 : vector<1x32xf32>
    %70 = arith.subf %68, %69 : vector<1x32xf32>
    %cst_28 = arith.constant 0.000000e+00 : f32
    %71 = vector.broadcast %cst_28 : f32 to vector<1x32xf32>
    %72 = arith.maximumf %70, %71 : vector<1x32xf32>
    %cst_29 = arith.constant 9.99999974E-6 : f32
    %73 = vector.broadcast %cst_29 : f32 to vector<1x32xf32>
    %74 = arith.addf %72, %73 : vector<1x32xf32>
    %75 = math.rsqrt %74 : vector<1x32xf32>
    %76 = arith.mulf %75, %58 : vector<1x32xf32>
    %77 = arith.mulf %66, %76 : vector<1x32xf32>
    %78 = arith.subf %59, %77 : vector<1x32xf32>
    %79 = vector.broadcast %76 : vector<1x32xf32> to vector<8x32xf32>
    %80 = arith.mulf %57, %79 : vector<8x32xf32>
    %81 = vector.broadcast %78 : vector<1x32xf32> to vector<8x32xf32>
    %82 = arith.addf %80, %81 : vector<8x32xf32>
    %cst_30 = arith.constant 0.00999999977 : f32
    %83 = vector.broadcast %cst_30 : f32 to vector<8x32xf32>
    %84 = arith.mulf %83, %82 : vector<8x32xf32>
    %85 = arith.maximumf %82, %84 : vector<8x32xf32>
    %c80 = arith.constant 80 : index
    %c0_31 = arith.constant 0 : index
    %86 = vector.load %arg1[%c80, %c0_31] : memref<176x128xf32, #tpu.memory_space<vmem>>, vector<32x32xf32>
    %cst_32 = arith.constant dense<0.000000e+00> : vector<8x32xf32>
    %87 = tpu.matmul %85, %86, %cst_32 {dimension_numbers = #tpu.dot_dimension_numbers<[1], [0], [0], [1], [0, 0, 1, 1], [], []>} : vector<8x32xf32>, vector<32x32xf32>, vector<8x32xf32> -> vector<8x32xf32>
    %c4 = arith.constant 4 : index
    %c0_33 = arith.constant 0 : index
    %88 = vector.load %arg1[%c4, %c0_33] : memref<176x128xf32, #tpu.memory_space<vmem>>, vector<1x32xf32>
    %c8 = arith.constant 8 : index
    %c0_34 = arith.constant 0 : index
    %89 = vector.load %arg1[%c8, %c0_34] : memref<176x128xf32, #tpu.memory_space<vmem>>, vector<1x32xf32>
    %cst_35 = arith.constant dense<0.000000e+00> : vector<32xf32>
    %90 = vector.multi_reduction <add>, %87, %cst_35 [0] : vector<8x32xf32> to vector<32xf32>
    %91 = vector.shape_cast %90 : vector<32xf32> to vector<1x32xf32>
    %92 = arith.mulf %87, %87 : vector<8x32xf32>
    %cst_36 = arith.constant dense<0.000000e+00> : vector<32xf32>
    %93 = vector.multi_reduction <add>, %92, %cst_36 [0] : vector<8x32xf32> to vector<32xf32>
    %94 = vector.shape_cast %93 : vector<32xf32> to vector<1x32xf32>
    %cst_37 = arith.constant 1.250000e-01 : f32
    %95 = vector.broadcast %cst_37 : f32 to vector<1x32xf32>
    %96 = arith.mulf %91, %95 : vector<1x32xf32>
    %cst_38 = arith.constant 1.250000e-01 : f32
    %97 = vector.broadcast %cst_38 : f32 to vector<1x32xf32>
    %98 = arith.mulf %94, %97 : vector<1x32xf32>
    %99 = arith.mulf %96, %96 : vector<1x32xf32>
    %100 = arith.subf %98, %99 : vector<1x32xf32>
    %cst_39 = arith.constant 0.000000e+00 : f32
    %101 = vector.broadcast %cst_39 : f32 to vector<1x32xf32>
    %102 = arith.maximumf %100, %101 : vector<1x32xf32>
    %cst_40 = arith.constant 9.99999974E-6 : f32
    %103 = vector.broadcast %cst_40 : f32 to vector<1x32xf32>
    %104 = arith.addf %102, %103 : vector<1x32xf32>
    %105 = math.rsqrt %104 : vector<1x32xf32>
    %106 = arith.mulf %105, %88 : vector<1x32xf32>
    %107 = arith.mulf %96, %106 : vector<1x32xf32>
    %108 = arith.subf %89, %107 : vector<1x32xf32>
    %109 = vector.broadcast %106 : vector<1x32xf32> to vector<8x32xf32>
    %110 = arith.mulf %87, %109 : vector<8x32xf32>
    %111 = vector.broadcast %108 : vector<1x32xf32> to vector<8x32xf32>
    %112 = arith.addf %110, %111 : vector<8x32xf32>
    %cst_41 = arith.constant 0.00999999977 : f32
    %113 = vector.broadcast %cst_41 : f32 to vector<8x32xf32>
    %114 = arith.mulf %113, %112 : vector<8x32xf32>
    %115 = arith.maximumf %112, %114 : vector<8x32xf32>
    %c112 = arith.constant 112 : index
    %c0_42 = arith.constant 0 : index
    %116 = vector.load %arg1[%c112, %c0_42] : memref<176x128xf32, #tpu.memory_space<vmem>>, vector<32x32xf32>
    %cst_43 = arith.constant dense<0.000000e+00> : vector<8x32xf32>
    %117 = tpu.matmul %115, %116, %cst_43 {dimension_numbers = #tpu.dot_dimension_numbers<[1], [0], [0], [1], [0, 0, 1, 1], [], []>} : vector<8x32xf32>, vector<32x32xf32>, vector<8x32xf32> -> vector<8x32xf32>
    %c5 = arith.constant 5 : index
    %c0_44 = arith.constant 0 : index
    %118 = vector.load %arg1[%c5, %c0_44] : memref<176x128xf32, #tpu.memory_space<vmem>>, vector<1x32xf32>
    %c9 = arith.constant 9 : index
    %c0_45 = arith.constant 0 : index
    %119 = vector.load %arg1[%c9, %c0_45] : memref<176x128xf32, #tpu.memory_space<vmem>>, vector<1x32xf32>
    %cst_46 = arith.constant dense<0.000000e+00> : vector<32xf32>
    %120 = vector.multi_reduction <add>, %117, %cst_46 [0] : vector<8x32xf32> to vector<32xf32>
    %121 = vector.shape_cast %120 : vector<32xf32> to vector<1x32xf32>
    %122 = arith.mulf %117, %117 : vector<8x32xf32>
    %cst_47 = arith.constant dense<0.000000e+00> : vector<32xf32>
    %123 = vector.multi_reduction <add>, %122, %cst_47 [0] : vector<8x32xf32> to vector<32xf32>
    %124 = vector.shape_cast %123 : vector<32xf32> to vector<1x32xf32>
    %cst_48 = arith.constant 1.250000e-01 : f32
    %125 = vector.broadcast %cst_48 : f32 to vector<1x32xf32>
    %126 = arith.mulf %121, %125 : vector<1x32xf32>
    %cst_49 = arith.constant 1.250000e-01 : f32
    %127 = vector.broadcast %cst_49 : f32 to vector<1x32xf32>
    %128 = arith.mulf %124, %127 : vector<1x32xf32>
    %129 = arith.mulf %126, %126 : vector<1x32xf32>
    %130 = arith.subf %128, %129 : vector<1x32xf32>
    %cst_50 = arith.constant 0.000000e+00 : f32
    %131 = vector.broadcast %cst_50 : f32 to vector<1x32xf32>
    %132 = arith.maximumf %130, %131 : vector<1x32xf32>
    %cst_51 = arith.constant 9.99999974E-6 : f32
    %133 = vector.broadcast %cst_51 : f32 to vector<1x32xf32>
    %134 = arith.addf %132, %133 : vector<1x32xf32>
    %135 = math.rsqrt %134 : vector<1x32xf32>
    %136 = arith.mulf %135, %118 : vector<1x32xf32>
    %137 = arith.mulf %126, %136 : vector<1x32xf32>
    %138 = arith.subf %119, %137 : vector<1x32xf32>
    %139 = vector.broadcast %136 : vector<1x32xf32> to vector<8x32xf32>
    %140 = arith.mulf %117, %139 : vector<8x32xf32>
    %141 = vector.broadcast %138 : vector<1x32xf32> to vector<8x32xf32>
    %142 = arith.addf %140, %141 : vector<8x32xf32>
    %cst_52 = arith.constant 0.00999999977 : f32
    %143 = vector.broadcast %cst_52 : f32 to vector<8x32xf32>
    %144 = arith.mulf %143, %142 : vector<8x32xf32>
    %145 = arith.maximumf %142, %144 : vector<8x32xf32>
    %c144 = arith.constant 144 : index
    %c0_53 = arith.constant 0 : index
    %146 = vector.load %arg1[%c144, %c0_53] : memref<176x128xf32, #tpu.memory_space<vmem>>, vector<32x128xf32>
    %cst_54 = arith.constant dense<0.000000e+00> : vector<8x128xf32>
    %147 = tpu.matmul %145, %146, %cst_54 {dimension_numbers = #tpu.dot_dimension_numbers<[1], [0], [0], [1], [0, 0, 1, 1], [], []>} : vector<8x32xf32>, vector<32x128xf32>, vector<8x128xf32> -> vector<8x128xf32>
    %c10 = arith.constant 10 : index
    %c0_55 = arith.constant 0 : index
    %148 = vector.load %arg1[%c10, %c0_55] : memref<176x128xf32, #tpu.memory_space<vmem>>, vector<1x128xf32>
    %149 = vector.broadcast %148 : vector<1x128xf32> to vector<8x128xf32>
    %150 = arith.addf %147, %149 : vector<8x128xf32>
    %c0_56 = arith.constant 0 : index
    %c0_57 = arith.constant 0 : index
    %151 = vector.load %arg2[%c0_56, %c0_57] : memref<8x128xf32, #tpu.memory_space<vmem>>, vector<8x128xf32>
    tpu.vector_store %arg2[%c0_56, %c0_57], %150 {strides = array<i32>} : memref<8x128xf32, #tpu.memory_space<vmem>>, vector<8x128xf32>,
    return
  }
}

</mosaic_0001>

<llo_original>
// kernel: gender_classifier_forward.1
$region0: #{gender_classifier_forward.1}
  #allocation0 [shape = 'u32[]', space=smem, size = 0x4, offset = 0x4, fixed_abs, tag = 'smem constant byte address 0x4 - core index']
  #allocation1 [shape = 'u32[144,128]{1,0:T(1,128)}', space=vmem, size = 0x12000, scoped, tag = 'internal scratch']
  %s0 = inlined_call_operand.hbm [shape: f32[8,32], index: 0, kind: input, shape index: {}]
  %s1 = inlined_call_operand.hbm [shape: f32[176,128], index: 1, kind: input, shape index: {}]
  %s2 = inlined_call_operand.hbm [shape: f32[8,128], index: 2, kind: output, shape index: {}]
  %s3 = sld [smem:[#allocation0]]
  $region26: #{gender_classifier_forward.1} parent=0
    _
  %s5 = ssub.s32 1, %s3
  %s6 = scalar_select 0, %s5, %s3
  $region1: #{gender_classifier_forward.1} parent=0
    #allocation2 [shape = 'u8[4096]{0}', space=vmem, size = 0x1000, scoped, tag = 'input window, operand 0, single buffered']
    #allocation3 [shape = 's32[1]{0}', space=sflag, size = 0x4, scoped, tag = 'scoped memory for gender_classifier_forward.1']
    #allocation4 [shape = 's32[1]{0}', space=sflag, size = 0x4, scoped, tag = 'scoped memory for gender_classifier_forward.1']
    #allocation5 [shape = 'u8[90112]{0}', space=vmem, size = 0x16000, scoped, tag = 'input window, operand 1, single buffered']
    #allocation6 [shape = 's32[1]{0}', space=sflag, size = 0x4, scoped, tag = 'scoped memory for gender_classifier_forward.1']
    #allocation7 [shape = 'u8[4096]{0}', space=vmem, size = 0x1000, scoped, tag = 'output window, operand 0, single buffered']
    %7 = vsyncpa [#allocation3], 0
    %8 = vsyncpa [#allocation6], 0
    %9 = vsyncpa [#allocation4], 0
    // Predicated region
    $region2: #{gender_classifier_forward.1} parent=1 // pred_check
      _
    $region3: #{gender_classifier_forward.1} parent=1 // pred_check_branch
      %11 = sbr.rel (0) target = $region5
    $region4: #{gender_classifier_forward.1} parent=1 // pred_region
      %s13 = ssub.s32 128, 128
      %14 = vsyncadd [#allocation3], %s13
      %s16 = sshll.u32 [#allocation2], 4
      %s17 = int_to_ptr.vmem [resolvable:$true] %s16
      %19 = dma.hbm_to_vmem [thread:$0]  %s0, 128, %s17, [#allocation3]
    $region5: #{gender_classifier_forward.1} parent=1 // pred_fallthru
      _
    // Predicated region
    $region6: #{gender_classifier_forward.1} parent=1 // pred_check
      _
    $region7: #{gender_classifier_forward.1} parent=1 // pred_check_branch
      %21 = sbr.rel (0) target = $region9
    $region8: #{gender_classifier_forward.1} parent=1 // pred_region
      %s23 = ssub.s32 2816, 2816
      %24 = vsyncadd [#allocation6], %s23
      %s25 = sshll.u32 [#allocation5], 4
      %s26 = int_to_ptr.vmem [resolvable:$true] %s25
      %31 = dma.hbm_to_vmem [thread:$0]  %s1, 2816, %s26, [#allocation6], 128, 128, 8
    $region9: #{gender_classifier_forward.1} parent=1 // pred_fallthru
      _
    // Predicated region
    $region10: #{gender_classifier_forward.1} parent=1 // pred_check
      _
    $region11: #{gender_classifier_forward.1} parent=1 // pred_check_branch
      %33 = sbr.rel (0) target = $region13
    $region12: #{gender_classifier_forward.1} parent=1 // pred_region
      %34 = dma.done [#allocation3], 128
    $region13: #{gender_classifier_forward.1} parent=1 // pred_fallthru
      _
    // Predicated region
    $region14: #{gender_classifier_forward.1} parent=1 // pred_check
      _
    $region15: #{gender_classifier_forward.1} parent=1 // pred_check_branch
      %36 = sbr.rel (0) target = $region17
    $region16: #{gender_classifier_forward.1} parent=1 // pred_region
      %37 = dma.done [#allocation6], 2816
    $region17: #{gender_classifier_forward.1} parent=1 // pred_fallthru
      _
    %v38 = vld [vmem:[#allocation2] sm:$0xff]
    %v39 = vld [vmem:[#allocation5] sm:$0x1]
    %v40 = vld [vmem:[#allocation5 + $0x1] sm:$0x1]
    %vm41 = vcmask 261120
    %v42 = vsel %vm41, %v38, 0.0
    %v43 = vrot.slane %v42, 4
    %v44 = vadd.f32 %v42, %v43
    %v45 = vrot.slane %v44, 2
    %v46 = vadd.f32 %v44, %v45
    %v47 = vrot.slane %v46, 1
    %v48 = vadd.f32 %v46, %v47
    %v49 = vmul.f32 %v38, %v38
    %v50 = vsel %vm41, %v49, 0.0
    %v51 = vrot.slane %v50, 4
    %v52 = vadd.f32 %v50, %v51
    %v53 = vrot.slane %v52, 2
    %v54 = vadd.f32 %v52, %v53
    %v55 = vrot.slane %v54, 1
    %v56 = vadd.f32 %v54, %v55
    %v57 = vmul.f32 %v48, 0.125
    %v58 = vmul.f32 %v56, 0.125
    %v59 = vmul.f32 %v57, %v57
    %v60 = vsub.f32 %v58, %v59
    %v61 = vmax.f32 %v60, 0.0
    %v62 = vadd.f32 %v61, 1e-05
    %v63 = vrsqrt.pop %v62
    %v64 = vmul.f32 %v63, %v39
    %v65 = vmul.f32 %v57, %v64
    %v66 = vsub.f32 %v40, %v65
    %v67 = vlaneseq
    %v68 = vshrl.u32 %v67, 7
    %v69 = vsub.s32 0, %v68
    %v70 = vrot.slane %v64, %v69
    %v71 = vmul.f32 %v38, %v70
    %v72 = vlaneseq
    %v73 = vshrl.u32 %v72, 7
    %v74 = vsub.s32 0, %v73
    %v75 = vrot.slane %v66, %v74
    %v76 = vadd.f32 %v71, %v75
    %v77 = vld [vmem:[#allocation5 + $0x10] sm:$0xff]
    %v78 = vld [vmem:[#allocation5 + $0x18] sm:$0xff]
    %v79 = vld [vmem:[#allocation5 + $0x20] sm:$0xff]
    %v80 = vld [vmem:[#allocation5 + $0x28] sm:$0xff]
    %v82 = vsel %vm41, %v76, 0
    %84 = vmatprep.subr.mxu0 0.0
    %85 = vmatpush1.msra.mxu0 %v77
    %86 = vmatprep.subr.mxu0 0.0
    %87 = vmatpush1.msra.mxu0 %v78
    %88 = vmatprep.subr.mxu0 0.0
    %89 = vmatpush1.msra.mxu0 %v79
    %90 = vmatprep.subr.mxu0 0.0
    %91 = vmatpush1.msra.mxu0 %v80
    %92 = vmatprep.subr.mxu0 0.0
    %93 = vmatpush1.msra.mxu0 0.0
    %94 = vmatprep.subr.mxu0 0.0
    %95 = vmatpush1.msra.mxu0 0.0
    %96 = vmatprep.subr.mxu0 0.0
    %97 = vmatpush1.msra.mxu0 0.0
    %98 = vmatprep.subr.mxu0 0.0
    %99 = vmatpush1.msra.mxu0 0.0
    %100 = vmatprep.subr.mxu0 0.0
    %101 = vmatpush1.msra.mxu0 0.0
    %102 = vmatprep.subr.mxu0 0.0
    %103 = vmatpush1.msra.mxu0 0.0
    %104 = vmatprep.subr.mxu0 0.0
    %105 = vmatpush1.msra.mxu0 0.0
    %106 = vmatprep.subr.mxu0 0.0
    %107 = vmatpush1.msra.mxu0 0.0
    %108 = vmatprep.subr.mxu0 0.0
    %109 = vmatpush1.msra.mxu0 0.0
    %110 = vmatprep.subr.mxu0 0.0
    %111 = vmatpush1.msra.mxu0 0.0
    %112 = vmatprep.subr.mxu0 0.0
    %113 = vmatpush1.msra.mxu0 0.0
    %114 = vmatprep.subr.mxu0 0.0
    %115 = vmatpush1.msra.mxu0 0.0
    %116 = vmatprep.subr.mxu0 0.0
    %117 = vmatpush1.msra.mxu0 0.0
    %118 = vmatprep.subr.mxu0 0.0
    %119 = vmatpush1.msra.mxu0 0.0
    %120 = vmatprep.subr.mxu0 0.0
    %121 = vmatpush1.msra.mxu0 0.0
    %122 = vmatprep.subr.mxu0 0.0
    %123 = vmatpush1.msra.mxu0 0.0
    %124 = vmatprep.subr.mxu0 0.0
    %125 = vmatpush1.msra.mxu0 0.0
    %126 = vmatprep.subr.mxu0 0.0
    %127 = vmatpush1.msra.mxu0 0.0
    %128 = vmatprep.subr.mxu0 0.0
    %129 = vmatpush1.msra.mxu0 0.0
    %130 = vmatprep.subr.mxu0 0.0
    %131 = vmatpush1.msra.mxu0 0.0
    %132 = vmatprep.subr.mxu0 0.0
    %133 = vmatpush1.msra.mxu0 0.0
    %134 = vmatprep.subr.mxu0 0.0
    %135 = vmatpush1.msra.mxu0 0.0
    %136 = vmatprep.subr.mxu0 0.0
    %137 = vmatpush1.msra.mxu0 0.0
    %138 = vmatprep.subr.mxu0 0.0
    %139 = vmatpush1.msra.mxu0 0.0
    %140 = vmatprep.subr.mxu0 0.0
    %141 = vmatpush1.msra.mxu0 0.0
    %142 = vmatprep.subr.mxu0 0.0
    %143 = vmatpush1.msra.mxu0 0.0
    %144 = vmatprep.subr.mxu0 0.0
    %145 = vmatpush1.msra.mxu0 0.0
    %146 = vmatprep.subr.mxu0 0.0
    %147 = vmatpush1.msra.mxu0 0.0
    %148 = vmatprep.mubr.f32.mxu0 0.0
    %149 = vmatmul.mubr.f32.gmra.mrb[0].mxu0 %v82
    %v150 = vpop.f32.mrb[0].mxu0
    %v151 = vadd.f32 0.0, %v150
    %v152 = vpop.f32.mrb[0].mxu0
    %153 = vdwg.mxu0
    %v154 = vld [vmem:[#allocation5 + $0x2] sm:$0x1]
    %v155 = vld [vmem:[#allocation5 + $0x6] sm:$0x1]
    %v156 = vsel %vm41, %v151, 0.0
    %v157 = vrot.slane %v156, 4
    %v158 = vadd.f32 %v156, %v157
    %v159 = vrot.slane %v158, 2
    %v160 = vadd.f32 %v158, %v159
    %v161 = vrot.slane %v160, 1
    %v162 = vadd.f32 %v160, %v161
    %v163 = vmul.f32 %v151, %v151
    %v164 = vsel %vm41, %v163, 0.0
    %v165 = vrot.slane %v164, 4
    %v166 = vadd.f32 %v164, %v165
    %v167 = vrot.slane %v166, 2
    %v168 = vadd.f32 %v166, %v167
    %v169 = vrot.slane %v168, 1
    %v170 = vadd.f32 %v168, %v169
    %v171 = vmul.f32 %v162, 0.125
    %v172 = vmul.f32 %v170, 0.125
    %v173 = vmul.f32 %v171, %v171
    %v174 = vsub.f32 %v172, %v173
    %v175 = vmax.f32 %v174, 0.0
    %v176 = vadd.f32 %v175, 1e-05
    %v177 = vrsqrt.pop %v176
    %v178 = vmul.f32 %v177, %v154
    %v179 = vmul.f32 %v171, %v178
    %v180 = vsub.f32 %v155, %v179
    %v181 = vlaneseq
    %v182 = vshrl.u32 %v181, 7
    %v183 = vsub.s32 0, %v182
    %v184 = vrot.slane %v178, %v183
    %v185 = vmul.f32 %v151, %v184
    %v186 = vlaneseq
    %v187 = vshrl.u32 %v186, 7
    %v188 = vsub.s32 0, %v187
    %v189 = vrot.slane %v180, %v188
    %v190 = vadd.f32 %v185, %v189
    %v191 = vmul.f32 %v190, 0.01
    %v192 = vmax.f32 %v190, %v191
    %v193 = vld [vmem:[#allocation5 + $0x30] sm:$0xff]
    %v194 = vld [vmem:[#allocation5 + $0x38] sm:$0xff]
    %v195 = vld [vmem:[#allocation5 + $0x40] sm:$0xff]
    %v196 = vld [vmem:[#allocation5 + $0x48] sm:$0xff]
    %v198 = vsel %vm41, %v192, 0
    %200 = vmatprep.subr.mxu0 0.0
    %201 = vmatpush1.msra.mxu0 %v193
    %202 = vmatprep.subr.mxu0 0.0
    %203 = vmatpush1.msra.mxu0 %v194
    %204 = vmatprep.subr.mxu0 0.0
    %205 = vmatpush1.msra.mxu0 %v195
    %206 = vmatprep.subr.mxu0 0.0
    %207 = vmatpush1.msra.mxu0 %v196
    %208 = vmatprep.subr.mxu0 0.0
    %209 = vmatpush1.msra.mxu0 0.0
    %210 = vmatprep.subr.mxu0 0.0
    %211 = vmatpush1.msra.mxu0 0.0
    %212 = vmatprep.subr.mxu0 0.0
    %213 = vmatpush1.msra.mxu0 0.0
    %214 = vmatprep.subr.mxu0 0.0
    %215 = vmatpush1.msra.mxu0 0.0
    %216 = vmatprep.subr.mxu0 0.0
    %217 = vmatpush1.msra.mxu0 0.0
    %218 = vmatprep.subr.mxu0 0.0
    %219 = vmatpush1.msra.mxu0 0.0
    %220 = vmatprep.subr.mxu0 0.0
    %221 = vmatpush1.msra.mxu0 0.0
    %222 = vmatprep.subr.mxu0 0.0
    %223 = vmatpush1.msra.mxu0 0.0
    %224 = vmatprep.subr.mxu0 0.0
    %225 = vmatpush1.msra.mxu0 0.0
    %226 = vmatprep.subr.mxu0 0.0
    %227 = vmatpush1.msra.mxu0 0.0
    %228 = vmatprep.subr.mxu0 0.0
    %229 = vmatpush1.msra.mxu0 0.0
    %230 = vmatprep.subr.mxu0 0.0
    %231 = vmatpush1.msra.mxu0 0.0
    %232 = vmatprep.subr.mxu0 0.0
    %233 = vmatpush1.msra.mxu0 0.0
    %234 = vmatprep.subr.mxu0 0.0
    %235 = vmatpush1.msra.mxu0 0.0
    %236 = vmatprep.subr.mxu0 0.0
    %237 = vmatpush1.msra.mxu0 0.0
    %238 = vmatprep.subr.mxu0 0.0
    %239 = vmatpush1.msra.mxu0 0.0
    %240 = vmatprep.subr.mxu0 0.0
    %241 = vmatpush1.msra.mxu0 0.0
    %242 = vmatprep.subr.mxu0 0.0
    %243 = vmatpush1.msra.mxu0 0.0
    %244 = vmatprep.subr.mxu0 0.0
    %245 = vmatpush1.msra.mxu0 0.0
    %246 = vmatprep.subr.mxu0 0.0
    %247 = vmatpush1.msra.mxu0 0.0
    %248 = vmatprep.subr.mxu0 0.0
    %249 = vmatpush1.msra.mxu0 0.0
    %250 = vmatprep.subr.mxu0 0.0
    %251 = vmatpush1.msra.mxu0 0.0
    %252 = vmatprep.subr.mxu0 0.0
    %253 = vmatpush1.msra.mxu0 0.0
    %254 = vmatprep.subr.mxu0 0.0
    %255 = vmatpush1.msra.mxu0 0.0
    %256 = vmatprep.subr.mxu0 0.0
    %257 = vmatpush1.msra.mxu0 0.0
    %258 = vmatprep.subr.mxu0 0.0
    %259 = vmatpush1.msra.mxu0 0.0
    %260 = vmatprep.subr.mxu0 0.0
    %261 = vmatpush1.msra.mxu0 0.0
    %262 = vmatprep.subr.mxu0 0.0
    %263 = vmatpush1.msra.mxu0 0.0
    %264 = vmatprep.mubr.f32.mxu0 0.0
    %265 = vmatmul.mubr.f32.gmra.mrb[0].mxu0 %v198
    %v266 = vpop.f32.mrb[0].mxu0
    %v267 = vadd.f32 0.0, %v266
    %v268 = vpop.f32.mrb[0].mxu0
    %269 = vdwg.mxu0
    %v270 = vld [vmem:[#allocation5 + $0x3] sm:$0x1]
    %v271 = vld [vmem:[#allocation5 + $0x7] sm:$0x1]
    %v272 = vsel %vm41, %v267, 0.0
    %v273 = vrot.slane %v272, 4
    %v274 = vadd.f32 %v272, %v273
    %v275 = vrot.slane %v274, 2
    %v276 = vadd.f32 %v274, %v275
    %v277 = vrot.slane %v276, 1
    %v278 = vadd.f32 %v276, %v277
    %v279 = vmul.f32 %v267, %v267
    %v280 = vsel %vm41, %v279, 0.0
    %v281 = vrot.slane %v280, 4
    %v282 = vadd.f32 %v280, %v281
    %v283 = vrot.slane %v282, 2
    %v284 = vadd.f32 %v282, %v283
    %v285 = vrot.slane %v284, 1
    %v286 = vadd.f32 %v284, %v285
    %v287 = vmul.f32 %v278, 0.125
    %v288 = vmul.f32 %v286, 0.125
    %v289 = vmul.f32 %v287, %v287
    %v290 = vsub.f32 %v288, %v289
    %v291 = vmax.f32 %v290, 0.0
    %v292 = vadd.f32 %v291, 1e-05
    %v293 = vrsqrt.pop %v292
    %v294 = vmul.f32 %v293, %v270
    %v295 = vmul.f32 %v287, %v294
    %v296 = vsub.f32 %v271, %v295
    %v297 = vlaneseq
    %v298 = vshrl.u32 %v297, 7
    %v299 = vsub.s32 0, %v298
    %v300 = vrot.slane %v294, %v299
    %v301 = vmul.f32 %v267, %v300
    %v302 = vlaneseq
    %v303 = vshrl.u32 %v302, 7
    %v304 = vsub.s32 0, %v303
    %v305 = vrot.slane %v296, %v304
    %v306 = vadd.f32 %v301, %v305
    %v307 = vmul.f32 %v306, 0.01
    %v308 = vmax.f32 %v306, %v307
    %v309 = vld [vmem:[#allocation5 + $0x50] sm:$0xff]
    %v310 = vld [vmem:[#allocation5 + $0x58] sm:$0xff]
    %v311 = vld [vmem:[#allocation5 + $0x60] sm:$0xff]
    %v312 = vld [vmem:[#allocation5 + $0x68] sm:$0xff]
    %v314 = vsel %vm41, %v308, 0
    %316 = vmatprep.subr.mxu0 0.0
    %317 = vmatpush1.msra.mxu0 %v309
    %318 = vmatprep.subr.mxu0 0.0
    %319 = vmatpush1.msra.mxu0 %v310
    %320 = vmatprep.subr.mxu0 0.0
    %321 = vmatpush1.msra.mxu0 %v311
    %322 = vmatprep.subr.mxu0 0.0
    %323 = vmatpush1.msra.mxu0 %v312
    %324 = vmatprep.subr.mxu0 0.0
    %325 = vmatpush1.msra.mxu0 0.0
    %326 = vmatprep.subr.mxu0 0.0
    %327 = vmatpush1.msra.mxu0 0.0
    %328 = vmatprep.subr.mxu0 0.0
    %329 = vmatpush1.msra.mxu0 0.0
    %330 = vmatprep.subr.mxu0 0.0
    %331 = vmatpush1.msra.mxu0 0.0
    %332 = vmatprep.subr.mxu0 0.0
    %333 = vmatpush1.msra.mxu0 0.0
    %334 = vmatprep.subr.mxu0 0.0
    %335 = vmatpush1.msra.mxu0 0.0
    %336 = vmatprep.subr.mxu0 0.0
    %337 = vmatpush1.msra.mxu0 0.0
    %338 = vmatprep.subr.mxu0 0.0
    %339 = vmatpush1.msra.mxu0 0.0
    %340 = vmatprep.subr.mxu0 0.0
    %341 = vmatpush1.msra.mxu0 0.0
    %342 = vmatprep.subr.mxu0 0.0
    %343 = vmatpush1.msra.mxu0 0.0
    %344 = vmatprep.subr.mxu0 0.0
    %345 = vmatpush1.msra.mxu0 0.0
    %346 = vmatprep.subr.mxu0 0.0
    %347 = vmatpush1.msra.mxu0 0.0
    %348 = vmatprep.subr.mxu0 0.0
    %349 = vmatpush1.msra.mxu0 0.0
    %350 = vmatprep.subr.mxu0 0.0
    %351 = vmatpush1.msra.mxu0 0.0
    %352 = vmatprep.subr.mxu0 0.0
    %353 = vmatpush1.msra.mxu0 0.0
    %354 = vmatprep.subr.mxu0 0.0
    %355 = vmatpush1.msra.mxu0 0.0
    %356 = vmatprep.subr.mxu0 0.0
    %357 = vmatpush1.msra.mxu0 0.0
    %358 = vmatprep.subr.mxu0 0.0
    %359 = vmatpush1.msra.mxu0 0.0
    %360 = vmatprep.subr.mxu0 0.0
    %361 = vmatpush1.msra.mxu0 0.0
    %362 = vmatprep.subr.mxu0 0.0
    %363 = vmatpush1.msra.mxu0 0.0
    %364 = vmatprep.subr.mxu0 0.0
    %365 = vmatpush1.msra.mxu0 0.0
    %366 = vmatprep.subr.mxu0 0.0
    %367 = vmatpush1.msra.mxu0 0.0
    %368 = vmatprep.subr.mxu0 0.0
    %369 = vmatpush1.msra.mxu0 0.0
    %370 = vmatprep.subr.mxu0 0.0
    %371 = vmatpush1.msra.mxu0 0.0
    %372 = vmatprep.subr.mxu0 0.0
    %373 = vmatpush1.msra.mxu0 0.0
    %374 = vmatprep.subr.mxu0 0.0
    %375 = vmatpush1.msra.mxu0 0.0
    %376 = vmatprep.subr.mxu0 0.0
    %377 = vmatpush1.msra.mxu0 0.0
    %378 = vmatprep.subr.mxu0 0.0
    %379 = vmatpush1.msra.mxu0 0.0
    %380 = vmatprep.mubr.f32.mxu0 0.0
    %381 = vmatmul.mubr.f32.gmra.mrb[0].mxu0 %v314
    %v382 = vpop.f32.mrb[0].mxu0
    %v383 = vadd.f32 0.0, %v382
    %v384 = vpop.f32.mrb[0].mxu0
    %385 = vdwg.mxu0
    %v386 = vld [vmem:[#allocation5 + $0x4] sm:$0x1]
    %v387 = vld [vmem:[#allocation5 + $0x8] sm:$0x1]
    %v388 = vsel %vm41, %v383, 0.0
    %v389 = vrot.slane %v388, 4
    %v390 = vadd.f32 %v388, %v389
    %v391 = vrot.slane %v390, 2
    %v392 = vadd.f32 %v390, %v391
    %v393 = vrot.slane %v392, 1
    %v394 = vadd.f32 %v392, %v393
    %v395 = vmul.f32 %v383, %v383
    %v396 = vsel %vm41, %v395, 0.0
    %v397 = vrot.slane %v396, 4
    %v398 = vadd.f32 %v396, %v397
    %v399 = vrot.slane %v398, 2
    %v400 = vadd.f32 %v398, %v399
    %v401 = vrot.slane %v400, 1
    %v402 = vadd.f32 %v400, %v401
    %v403 = vmul.f32 %v394, 0.125
    %v404 = vmul.f32 %v402, 0.125
    %v405 = vmul.f32 %v403, %v403
    %v406 = vsub.f32 %v404, %v405
    %v407 = vmax.f32 %v406, 0.0
    %v408 = vadd.f32 %v407, 1e-05
    %v409 = vrsqrt.pop %v408
    %v410 = vmul.f32 %v409, %v386
    %v411 = vmul.f32 %v403, %v410
    %v412 = vsub.f32 %v387, %v411
    %v413 = vlaneseq
    %v414 = vshrl.u32 %v413, 7
    %v415 = vsub.s32 0, %v414
    %v416 = vrot.slane %v410, %v415
    %v417 = vmul.f32 %v383, %v416
    %v418 = vlaneseq
    %v419 = vshrl.u32 %v418, 7
    %v420 = vsub.s32 0, %v419
    %v421 = vrot.slane %v412, %v420
    %v422 = vadd.f32 %v417, %v421
    %v423 = vmul.f32 %v422, 0.01
    %v424 = vmax.f32 %v422, %v423
    %v425 = vld [vmem:[#allocation5 + $0x70] sm:$0xff]
    %v426 = vld [vmem:[#allocation5 + $0x78] sm:$0xff]
    %v427 = vld [vmem:[#allocation5 + $0x80] sm:$0xff]
    %v428 = vld [vmem:[#allocation5 + $0x88] sm:$0xff]
    %v430 = vsel %vm41, %v424, 0
    %432 = vmatprep.subr.mxu0 0.0
    %433 = vmatpush1.msra.mxu0 %v425
    %434 = vmatprep.subr.mxu0 0.0
    %435 = vmatpush1.msra.mxu0 %v426
    %436 = vmatprep.subr.mxu0 0.0
    %437 = vmatpush1.msra.mxu0 %v427
    %438 = vmatprep.subr.mxu0 0.0
    %439 = vmatpush1.msra.mxu0 %v428
    %440 = vmatprep.subr.mxu0 0.0
    %441 = vmatpush1.msra.mxu0 0.0
    %442 = vmatprep.subr.mxu0 0.0
    %443 = vmatpush1.msra.mxu0 0.0
    %444 = vmatprep.subr.mxu0 0.0
    %445 = vmatpush1.msra.mxu0 0.0
    %446 = vmatprep.subr.mxu0 0.0
    %447 = vmatpush1.msra.mxu0 0.0
    %448 = vmatprep.subr.mxu0 0.0
    %449 = vmatpush1.msra.mxu0 0.0
    %450 = vmatprep.subr.mxu0 0.0
    %451 = vmatpush1.msra.mxu0 0.0
    %452 = vmatprep.subr.mxu0 0.0
    %453 = vmatpush1.msra.mxu0 0.0
    %454 = vmatprep.subr.mxu0 0.0
    %455 = vmatpush1.msra.mxu0 0.0
    %456 = vmatprep.subr.mxu0 0.0
    %457 = vmatpush1.msra.mxu0 0.0
    %458 = vmatprep.subr.mxu0 0.0
    %459 = vmatpush1.msra.mxu0 0.0
    %460 = vmatprep.subr.mxu0 0.0
    %461 = vmatpush1.msra.mxu0 0.0
    %462 = vmatprep.subr.mxu0 0.0
    %463 = vmatpush1.msra.mxu0 0.0
    %464 = vmatprep.subr.mxu0 0.0
    %465 = vmatpush1.msra.mxu0 0.0
    %466 = vmatprep.subr.mxu0 0.0
    %467 = vmatpush1.msra.mxu0 0.0
    %468 = vmatprep.subr.mxu0 0.0
    %469 = vmatpush1.msra.mxu0 0.0
    %470 = vmatprep.subr.mxu0 0.0
    %471 = vmatpush1.msra.mxu0 0.0
    %472 = vmatprep.subr.mxu0 0.0
    %473 = vmatpush1.msra.mxu0 0.0
    %474 = vmatprep.subr.mxu0 0.0
    %475 = vmatpush1.msra.mxu0 0.0
    %476 = vmatprep.subr.mxu0 0.0
    %477 = vmatpush1.msra.mxu0 0.0
    %478 = vmatprep.subr.mxu0 0.0
    %479 = vmatpush1.msra.mxu0 0.0
    %480 = vmatprep.subr.mxu0 0.0
    %481 = vmatpush1.msra.mxu0 0.0
    %482 = vmatprep.subr.mxu0 0.0
    %483 = vmatpush1.msra.mxu0 0.0
    %484 = vmatprep.subr.mxu0 0.0
    %485 = vmatpush1.msra.mxu0 0.0
    %486 = vmatprep.subr.mxu0 0.0
    %487 = vmatpush1.msra.mxu0 0.0
    %488 = vmatprep.subr.mxu0 0.0
    %489 = vmatpush1.msra.mxu0 0.0
    %490 = vmatprep.subr.mxu0 0.0
    %491 = vmatpush1.msra.mxu0 0.0
    %492 = vmatprep.subr.mxu0 0.0
    %493 = vmatpush1.msra.mxu0 0.0
    %494 = vmatprep.subr.mxu0 0.0
    %495 = vmatpush1.msra.mxu0 0.0
    %496 = vmatprep.mubr.f32.mxu0 0.0
    %497 = vmatmul.mubr.f32.gmra.mrb[0].mxu0 %v430
    %v498 = vpop.f32.mrb[0].mxu0
    %v499 = vadd.f32 0.0, %v498
    %v500 = vpop.f32.mrb[0].mxu0
    %501 = vdwg.mxu0
    %v502 = vld [vmem:[#allocation5 + $0x5] sm:$0x1]
    %v503 = vld [vmem:[#allocation5 + $0x9] sm:$0x1]
    %v504 = vsel %vm41, %v499, 0.0
    %v505 = vrot.slane %v504, 4
    %v506 = vadd.f32 %v504, %v505
    %v507 = vrot.slane %v506, 2
    %v508 = vadd.f32 %v506, %v507
    %v509 = vrot.slane %v508, 1
    %v510 = vadd.f32 %v508, %v509
    %v511 = vmul.f32 %v499, %v499
    %v512 = vsel %vm41, %v511, 0.0
    %v513 = vrot.slane %v512, 4
    %v514 = vadd.f32 %v512, %v513
    %v515 = vrot.slane %v514, 2
    %v516 = vadd.f32 %v514, %v515
    %v517 = vrot.slane %v516, 1
    %v518 = vadd.f32 %v516, %v517
    %v519 = vmul.f32 %v510, 0.125
    %v520 = vmul.f32 %v518, 0.125
    %v521 = vmul.f32 %v519, %v519
    %v522 = vsub.f32 %v520, %v521
    %v523 = vmax.f32 %v522, 0.0
    %v524 = vadd.f32 %v523, 1e-05
    %v525 = vrsqrt.pop %v524
    %v526 = vmul.f32 %v525, %v502
    %v527 = vmul.f32 %v519, %v526
    %v528 = vsub.f32 %v503, %v527
    %v529 = vlaneseq
    %v530 = vshrl.u32 %v529, 7
    %v531 = vsub.s32 0, %v530
    %v532 = vrot.slane %v526, %v531
    %v533 = vmul.f32 %v499, %v532
    %v534 = vlaneseq
    %v535 = vshrl.u32 %v534, 7
    %v536 = vsub.s32 0, %v535
    %v537 = vrot.slane %v528, %v536
    %v538 = vadd.f32 %v533, %v537
    %v539 = vmul.f32 %v538, 0.01
    %v540 = vmax.f32 %v538, %v539
    %v541 = vld [vmem:[#allocation5 + $0x90] sm:$0xff]
    %v542 = vld [vmem:[#allocation5 + $0x98] sm:$0xff]
    %v543 = vld [vmem:[#allocation5 + $0xa0] sm:$0xff]
    %v544 = vld [vmem:[#allocation5 + $0xa8] sm:$0xff]
    %v545 = vld [vmem:[#allocation5 + $0xa] sm:$0x1]
    %v546 = vlaneseq
    %v547 = vshrl.u32 %v546, 7
    %v548 = vsub.s32 0, %v547
    %v549 = vrot.slane %v545, %v548
    %v551 = vsel %vm41, %v540, 0
    %553 = vmatprep.subr.mxu0 0.0
    %554 = vmatpush1.msra.mxu0 %v541
    %555 = vmatprep.subr.mxu0 0.0
    %556 = vmatpush1.msra.mxu0 %v542
    %557 = vmatprep.subr.mxu0 0.0
    %558 = vmatpush1.msra.mxu0 %v543
    %559 = vmatprep.subr.mxu0 0.0
    %560 = vmatpush1.msra.mxu0 %v544
    %561 = vmatprep.subr.mxu0 0.0
    %562 = vmatpush1.msra.mxu0 0.0
    %563 = vmatprep.subr.mxu0 0.0
    %564 = vmatpush1.msra.mxu0 0.0
    %565 = vmatprep.subr.mxu0 0.0
    %566 = vmatpush1.msra.mxu0 0.0
    %567 = vmatprep.subr.mxu0 0.0
    %568 = vmatpush1.msra.mxu0 0.0
    %569 = vmatprep.subr.mxu0 0.0
    %570 = vmatpush1.msra.mxu0 0.0
    %571 = vmatprep.subr.mxu0 0.0
    %572 = vmatpush1.msra.mxu0 0.0
    %573 = vmatprep.subr.mxu0 0.0
    %574 = vmatpush1.msra.mxu0 0.0
    %575 = vmatprep.subr.mxu0 0.0
    %576 = vmatpush1.msra.mxu0 0.0
    %577 = vmatprep.subr.mxu0 0.0
    %578 = vmatpush1.msra.mxu0 0.0
    %579 = vmatprep.subr.mxu0 0.0
    %580 = vmatpush1.msra.mxu0 0.0
    %581 = vmatprep.subr.mxu0 0.0
    %582 = vmatpush1.msra.mxu0 0.0
    %583 = vmatprep.subr.mxu0 0.0
    %584 = vmatpush1.msra.mxu0 0.0
    %585 = vmatprep.subr.mxu0 0.0
    %586 = vmatpush1.msra.mxu0 0.0
    %587 = vmatprep.subr.mxu0 0.0
    %588 = vmatpush1.msra.mxu0 0.0
    %589 = vmatprep.subr.mxu0 0.0
    %590 = vmatpush1.msra.mxu0 0.0
    %591 = vmatprep.subr.mxu0 0.0
    %592 = vmatpush1.msra.mxu0 0.0
    %593 = vmatprep.subr.mxu0 0.0
    %594 = vmatpush1.msra.mxu0 0.0
    %595 = vmatprep.subr.mxu0 0.0
    %596 = vmatpush1.msra.mxu0 0.0
    %597 = vmatprep.subr.mxu0 0.0
    %598 = vmatpush1.msra.mxu0 0.0
    %599 = vmatprep.subr.mxu0 0.0
    %600 = vmatpush1.msra.mxu0 0.0
    %601 = vmatprep.subr.mxu0 0.0
    %602 = vmatpush1.msra.mxu0 0.0
    %603 = vmatprep.subr.mxu0 0.0
    %604 = vmatpush1.msra.mxu0 0.0
    %605 = vmatprep.subr.mxu0 0.0
    %606 = vmatpush1.msra.mxu0 0.0
    %607 = vmatprep.subr.mxu0 0.0
    %608 = vmatpush1.msra.mxu0 0.0
    %609 = vmatprep.subr.mxu0 0.0
    %610 = vmatpush1.msra.mxu0 0.0
    %611 = vmatprep.subr.mxu0 0.0
    %612 = vmatpush1.msra.mxu0 0.0
    %613 = vmatprep.subr.mxu0 0.0
    %614 = vmatpush1.msra.mxu0 0.0
    %615 = vmatprep.subr.mxu0 0.0
    %616 = vmatpush1.msra.mxu0 0.0
    %617 = vmatprep.mubr.f32.mxu0 0.0
    %618 = vmatmul.mubr.f32.gmra.mrb[0].mxu0 %v551
    %v619 = vpop.f32.mrb[0].mxu0
    %v620 = vadd.f32 %v549, %v619
    %v621 = vpop.f32.mrb[0].mxu0
    %622 = vdwg.mxu0
    %623 = vst [vmem:[#allocation7] sm:$0xff] %v620
    // Predicated region
    $region18: #{gender_classifier_forward.1} parent=1 // pred_check
      _
    $region19: #{gender_classifier_forward.1} parent=1 // pred_check_branch
      %625 = sbr.rel (0) target = $region21
    $region20: #{gender_classifier_forward.1} parent=1 // pred_region
      %s627 = ssub.s32 128, 128
      %628 = vsyncadd [#allocation4], %s627
      %s630 = sshll.u32 [#allocation7], 4
      %s631 = int_to_ptr.vmem [resolvable:$true] %s630
      %633 = dma.vmem_to_hbm [thread:$0]  %s631, 128, %s2, [#allocation4]
    $region21: #{gender_classifier_forward.1} parent=1 // pred_fallthru
      _
    // Predicated region
    $region22: #{gender_classifier_forward.1} parent=1 // pred_check
      _
    $region23: #{gender_classifier_forward.1} parent=1 // pred_check_branch
      %635 = sbr.rel (0) target = $region25
    $region24: #{gender_classifier_forward.1} parent=1 // pred_region
      %636 = dma.done [#allocation4], 128
    $region25: #{gender_classifier_forward.1} parent=1 // pred_fallthru
      _
    %637 = vsyncpa [#allocation3], 1
    %638 = vsyncpa [#allocation6], 1
    %639 = vsyncpa [#allocation4], 1

</llo_original>
